<compile_context>
chip_gen: v7x
topology: tpu7x:2x2x1
jax: 0.10.0
libtpu: 0.0.40
codegen_flags: <defaults>
</compile_context>

<pallas_src>
import jax
import jax.numpy as jnp
from jax.experimental import pallas as pl
from jax.experimental.pallas import tpu as pltpu

DIM = 64            # `dim` in the PyTorch module
GLOVE_DIM = 300     # GloVe 6B 300-d vectors
N_GLOVE = 40        # synthetic small GloVe table (real one is 400k rows)
N_MYVOCAB = 12      # number0..5, '+', '-', '*', '/', 'sos', 'eos'

N_PAD = 128         # DIM (64) padded to one full lane width -> lane-dense stores


def _round_up(x, m):
    return ((x + m - 1) // m) * m


def embed_kernel(row_ref, table_ref, out_ref):
    # row_ref  : (TILE_S, 1)    int32 -- combined row index into the fused table
    # table_ref: (R_PAD, 128)   f32   -- [GloVe @ W^T ; myVocab] rows, zero padded
    #                                    (VMEM resident: index_map is constant)
    # out_ref  : (TILE_S, 128)  f32   -- lane-dense padded output
    tile_s = out_ref.shape[0]
    r_pad = table_ref.shape[0]

    # In-kernel gather as a one-hot matmul on the MXU (standard TPU gather idiom).
    lane_ids = jax.lax.broadcasted_iota(jnp.int32, (tile_s, r_pad), 1)
    onehot = (lane_ids == row_ref[...]).astype(jnp.float32)   # (TILE_S, R_PAD)
    out_ref[...] = jnp.dot(
        onehot, table_ref[...], preferred_element_type=jnp.float32
    ).astype(out_ref.dtype)


def my_embedding_forward(sequence, glove_table, emlin_w_t, myvocab_table,
                         *, tile_s=None):
    """sequence: (S, 2) int -> (1, S, DIM) f32 (matches the PyTorch module)."""
    sequence = sequence.astype(jnp.int32)
    s = sequence.shape[0]
    n_glove = glove_table.shape[0]
    n_vocab = myvocab_table.shape[0]

    # --- Precompute the frozen GloVe projection once (amortized over the batch). ---
    proj_table = jnp.dot(
        glove_table, emlin_w_t, precision=jax.lax.Precision.HIGHEST
    )                                                           # (n_glove, DIM) f32
    combined = jnp.concatenate(
        [proj_table, myvocab_table.astype(jnp.float32)], axis=0
    )                                                           # (n_glove+n_vocab, DIM)
    n_rows = combined.shape[0]
    r_pad = max(_round_up(n_rows, 8), 8)
    table_pad = jnp.pad(combined,
                        ((0, r_pad - n_rows), (0, N_PAD - DIM)))  # (r_pad, 128)

    # --- Fold (flag, idx) into one combined row index (clipped; OOB -> zero rows). ---
    flags = sequence[:, 0]
    idx = sequence[:, 1]
    rows = jnp.where(
        flags == 0,
        jnp.clip(idx, 0, n_glove - 1),
        n_glove + jnp.clip(idx, 0, n_vocab - 1),
    ).astype(jnp.int32)                                         # (s,)

    # --- Tile selection: big tiles, but >= 2 grid steps when S allows (v7x 2 TCs). ---
    if tile_s is None:
        tile_s = max(8, min(1024, _round_up(pl.cdiv(max(s, 1), 2), 8)))
    tile_s = _round_up(tile_s, 8)
    s_pad = _round_up(max(s, 1), tile_s)
    n_tiles = s_pad // tile_s

    rows_pad = jnp.pad(rows, (0, s_pad - s))[:, None]           # (s_pad, 1) int32

    out_pad = pl.pallas_call(
        embed_kernel,
        out_shape=jax.ShapeDtypeStruct((s_pad, N_PAD), jnp.float32),
        grid=(n_tiles,),
        in_specs=[
            pl.BlockSpec((tile_s, 1), lambda i: (i, 0)),        # row indices (streamed)
            pl.BlockSpec((r_pad, N_PAD), lambda i: (0, 0)),     # fused table (resident)
        ],
        out_specs=pl.BlockSpec((tile_s, N_PAD), lambda i: (i, 0)),
        compiler_params=pltpu.CompilerParams(
            dimension_semantics=("parallel",),
            # VMEM need is ~1 MiB; default scoped limit is plenty on v5e/v6e/v7x.
        ),
    )(rows_pad, table_pad)

    # Strip N- and S-padding; torch.stack(...).permute(1,0,2) -> (1, S, DIM).
    return out_pad[:s, :DIM][None, :, :]


def make_params(key):
    k1, k2, k3 = jax.random.split(key, 3)
    # Synthetic frozen GloVe table; row 0 plays the role of 'unk' -> zeros
    # (mirrors `glove.vectors[glove.stoi['unk']] = torch.zeros(300)`).
    glove_table = jax.random.normal(k1, (N_GLOVE, GLOVE_DIM), jnp.float32)
    glove_table = glove_table.at[0].set(0.0)
    # nn.Linear(300, dim, bias=False): weight (dim, 300); we store W^T (300, dim).
    bound = 1.0 / (GLOVE_DIM ** 0.5)
    emlin_w_t = jax.random.uniform(
        k2, (GLOVE_DIM, DIM), jnp.float32, minval=-bound, maxval=bound
    )
    # myVocabEmbedding.weight.data.uniform_(-1, 1)
    myvocab_table = jax.random.uniform(
        k3, (N_MYVOCAB, DIM), jnp.float32, minval=-1.0, maxval=1.0
    )
    return glove_table, emlin_w_t, myvocab_table


def ref_forward(sequence, glove_table, emlin_w_t, myvocab_table):
    """Pure-JAX reference of the PyTorch forward."""
    flags = sequence[:, 0]
    idx = sequence[:, 1]
    g_rows = jnp.take(glove_table, jnp.where(flags == 0, idx, 0), axis=0)
    g = jnp.dot(g_rows, emlin_w_t, precision=jax.lax.Precision.HIGHEST)
    v = jnp.take(myvocab_table, jnp.where(flags == 0, 0, idx), axis=0)
    return jnp.where((flags == 0)[:, None], g, v)[None, :, :]


if __name__ == "__main__":
    key = jax.random.PRNGKey(0)
    kp, kf, kg, kv = jax.random.split(key, 4)
    glove_table, emlin_w_t, myvocab_table = make_params(kp)

    # Small deterministic example: S=22 tokens of (flag, index) pairs.
    S = 22
    flags = jax.random.bernoulli(kf, 0.5, (S,)).astype(jnp.int32)
    glove_ids = jax.random.randint(kg, (S,), 0, N_GLOVE, jnp.int32)
    vocab_ids = jax.random.randint(kv, (S,), 0, N_MYVOCAB, jnp.int32)
    indices = jnp.where(flags == 0, glove_ids, vocab_ids)
    sequence = jnp.stack([flags, indices], axis=1)        # (S, 2)

    # tile_s=8 -> 3 grid steps (exercises the pipelined grid and S padding).
    out = my_embedding_forward(
        sequence, glove_table, emlin_w_t, myvocab_table, tile_s=8
    )
    out = jax.block_until_ready(out)

    assert out.shape == (1, S, DIM), out.shape
    ref = jax.block_until_ready(
        ref_forward(sequence, glove_table, emlin_w_t, myvocab_table)
    )
    assert jnp.all(jnp.isfinite(out))
    assert jnp.allclose(out, ref, rtol=2e-2, atol=2e-2), float(
        jnp.max(jnp.abs(out - ref))
    )
    print("KERNEL_OK")
</pallas_src>

<mosaic_0001>
module attributes {stable_mosaic.version = 11 : i64} {
  func.func @embed_kernel(%arg0: i32, %arg1: memref<8x1xi32, #tpu.memory_space<vmem>>, %arg2: memref<56x128xf32, #tpu.memory_space<vmem>>, %arg3: memref<8x128xf32, #tpu.memory_space<vmem>>) attributes {dimension_semantics = [#tpu.dimension_semantics<parallel>], iteration_bounds = array<i64: 3>, scalar_prefetch = 0 : i64, scratch_operands = 0 : i64, tpu.core_type = #tpu.core_type<tc>, window_params = [{transform_indices = @transform_0, window_bounds = array<i64: 8, 1>}, {pipeline_mode = #tpu.pipeline_mode<synchronous>, transform_indices = @transform_1, window_bounds = array<i64: 56, 128>}, {transform_indices = @transform_2, window_bounds = array<i64: 8, 128>}]} {
    %0 = tpu.iota {dimensions = array<i32: 1>} : vector<8x56xi32>
    %c0 = arith.constant 0 : index
    %c0_0 = arith.constant 0 : index
    %1 = vector.load %arg1[%c0, %c0_0] : memref<8x1xi32, #tpu.memory_space<vmem>>, vector<8x1xi32>
    %2 = vector.broadcast %1 : vector<8x1xi32> to vector<8x56xi32>
    %3 = arith.cmpi eq, %0, %2 : vector<8x56xi32>
    %4 = arith.extui %3 : vector<8x56xi1> to vector<8x56xi32>
    %5 = arith.sitofp %4 : vector<8x56xi32> to vector<8x56xf32>
    %c0_1 = arith.constant 0 : index
    %c0_2 = arith.constant 0 : index
    %6 = vector.load %arg2[%c0_1, %c0_2] : memref<56x128xf32, #tpu.memory_space<vmem>>, vector<56x128xf32>
    %cst = arith.constant dense<0.000000e+00> : vector<8x128xf32>
    %7 = tpu.matmul %5, %6, %cst {dimension_numbers = #tpu.dot_dimension_numbers<[1], [0], [0], [1], [0, 0, 1, 1], [], []>} : vector<8x56xf32>, vector<56x128xf32>, vector<8x128xf32> -> vector<8x128xf32>
    %c0_3 = arith.constant 0 : index
    %c0_4 = arith.constant 0 : index
    %8 = vector.load %arg3[%c0_3, %c0_4] : memref<8x128xf32, #tpu.memory_space<vmem>>, vector<8x128xf32>
    tpu.vector_store %arg3[%c0_3, %c0_4], %7 {strides = array<i32>} : memref<8x128xf32, #tpu.memory_space<vmem>>, vector<8x128xf32>,
    return
  }
  func.func @transform_0(%arg0: i32) -> (i32, i32) {
    %c0_i32 = arith.constant 0 : i32
    %c0_i32_0 = arith.constant 0 : i32
    return %arg0, %c0_i32 : i32, i32
  }
  func.func @transform_1(%arg0: i32) -> (i32, i32) {
    %c0_i32 = arith.constant 0 : i32
    %c0_i32_0 = arith.constant 0 : i32
    %c0_i32_1 = arith.constant 0 : i32
    return %c0_i32, %c0_i32_0 : i32, i32
  }
  func.func @transform_2(%arg0: i32) -> (i32, i32) {
    %c0_i32 = arith.constant 0 : i32
    %c0_i32_0 = arith.constant 0 : i32
    return %arg0, %c0_i32 : i32, i32
  }
}

</mosaic_0001>

<llo_original>
// kernel: tpu_custom_call.1
$region0: #{tpu_custom_call.1}
  #allocation0 [shape = 'u32[]', space=smem, size = 0x4, offset = 0x4, fixed_abs, tag = 'smem constant byte address 0x4 - core index']
  #allocation1 [shape = 'u32[144,128]{1,0:T(1,128)}', space=vmem, size = 0x12000, scoped, tag = 'internal scratch']
  %s0 = inlined_call_operand.vmem [shape: s32[24,1], index: 0, kind: input, shape index: {}]
  %s1 = inlined_call_operand.hbm [shape: f32[56,128], index: 1, kind: input, shape index: {}]
  %s2 = inlined_call_operand.hbm [shape: f32[24,128], index: 2, kind: output, shape index: {}]
  %s3 = sld [smem:[#allocation0]]
  $region45: #{tpu_custom_call.1} parent=0
    _
  %s5 = ssub.s32 1, %s3
  %s6 = scalar_select 0, %s5, %s3
  $region1: #{tpu_custom_call.1} parent=0
    #allocation2 [shape = 'u8[28672]{0}', space=vmem, size = 0x7000, scoped, tag = 'input window, operand 1, single buffered']
    #allocation3 [shape = 's32[2]{0}', space=sflag, size = 0x8, scoped, tag = 'scoped memory for tpu_custom_call.1']
    #allocation4 [shape = 's32[2]{0}', space=sflag, size = 0x8, scoped, tag = 'scoped memory for tpu_custom_call.1']
    #allocation5 [shape = 'u8[8192]{0}', space=vmem, size = 0x2000, scoped, tag = 'output window, operand 0']
    %7 = vsyncpa [#allocation3], 0
    %8 = vsyncpa [#allocation4], 0
    %s9 = scalar_lea.sflag [#allocation4], 1
    %10 = vsyncpa %s9, 0
    loop: start=0, step=1, limit=5
    $region2: #{tpu_custom_call.1} parent=1 // loop_pre_header
      _
    $region3: #{tpu_custom_call.1} parent=1 // loop_header
      %s12 = sphi 0, %s16
      %p13 = scmp.ge.s32.totalorder %s12, 5
      %s22 = sphi 0, %s24
      %s25 = sphi 0, %s22
      %s26 = sphi 0, %s25
      %s42 = sphi 0, %s26
      %s46 = sphi 0, %s46
      %s48 = sphi 0, %s46
      %s49 = sphi 0, %s48
      %s63 = sphi 0, %s49
      %s69 = sphi 0, %s71
      %s72 = sphi 0, %s69
      %s73 = sphi 0, %s72
      %s89 = sphi 0, %s73
    $region4: #{tpu_custom_call.1} parent=1 // loop_header_branch
      %15 = sbr.rel (%p13) target = $region8
    $region5: #{tpu_custom_call.1} parent=1 // loop_body
      %s17 = ssub.s32 %s12, 1
      %s18 = ssub.s32 %s12, 2
      %s19 = sadd.s32 %s12, 1
      %s20 = ssub.s32 %s12, %s19
      %p21 = scmp.eq.s32.totalorder %s20, 0
      %s23 = sadd.s32 %s22, 1
      %s24 = scalar_select %p21, %s22, %s23
      %p27 = pneg %p21
      %p28 = scmp.eq.s32.totalorder %s12, 2
      %p29 = por %p27, %p28
      %p30 = scmp.ne.s32.totalorder %s22, %s25
      %p31 = scmp.eq.s32.totalorder %s12, 0
      %p32 = por %p30, %p31
      %p33 = scmp.ne.s32.totalorder %s22, %s25
      %p34 = scmp.eq.s32.totalorder %s17, 2
      %p35 = por %p33, %p34
      %p36 = scmp.ne.s32.totalorder %s25, %s26
      %p37 = scmp.eq.s32.totalorder %s17, 0
      %p38 = por %p36, %p37
      %p39 = scmp.ne.s32.totalorder %s25, %s26
      %p40 = scmp.eq.s32.totalorder %s18, 2
      %p41 = por %p39, %p40
      %p43 = scmp.ne.s32.totalorder %s26, %s42
      %p44 = scmp.eq.s32.totalorder %s18, 0
      %p45 = por %p43, %p44
      %s47 = sadd.s32 %s46, 1
      %p50 = scmp.eq.s32.totalorder %s12, 2
      %p51 = scmp.ne.s32.totalorder %s46, %s48
      %p52 = scmp.eq.s32.totalorder %s12, 0
      %p53 = por %p51, %p52
      %p54 = scmp.ne.s32.totalorder %s46, %s48
      %p55 = scmp.eq.s32.totalorder %s17, 2
      %p56 = por %p54, %p55
      %p57 = scmp.ne.s32.totalorder %s48, %s49
      %p58 = scmp.eq.s32.totalorder %s17, 0
      %p59 = por %p57, %p58
      %p60 = scmp.ne.s32.totalorder %s48, %s49
      %p61 = scmp.eq.s32.totalorder %s18, 2
      %p62 = por %p60, %p61
      %p64 = scmp.ne.s32.totalorder %s49, %s63
      %p65 = scmp.eq.s32.totalorder %s18, 0
      %p66 = por %p64, %p65
      %s67 = ssub.s32 %s12, %s19
      %p68 = scmp.eq.s32.totalorder %s67, 0
      %s70 = sadd.s32 %s69, 1
      %s71 = scalar_select %p68, %s69, %s70
      %p74 = pneg %p68
      %p75 = scmp.eq.s32.totalorder %s12, 2
      %p76 = por %p74, %p75
      %p77 = scmp.ne.s32.totalorder %s69, %s72
      %p78 = scmp.eq.s32.totalorder %s12, 0
      %p79 = por %p77, %p78
      %p80 = scmp.ne.s32.totalorder %s69, %s72
      %p81 = scmp.eq.s32.totalorder %s17, 2
      %p82 = por %p80, %p81
      %p83 = scmp.ne.s32.totalorder %s72, %s73
      %p84 = scmp.eq.s32.totalorder %s17, 0
      %p85 = por %p83, %p84
      %p86 = scmp.ne.s32.totalorder %s72, %s73
      %p87 = scmp.eq.s32.totalorder %s18, 2
      %p88 = por %p86, %p87
      %p90 = scmp.ne.s32.totalorder %s73, %s89
      %p91 = scmp.eq.s32.totalorder %s18, 0
      %p92 = por %p90, %p91
      %p93 = scmp.le.s32.totalorder 1, %s12
      %p94 = scmp.lt.s32.totalorder %s12, 4
      %p95 = pnand %p93, %p94
      %p96 = pneg %p95
      // Predicated region
      $region9: #{tpu_custom_call.1} parent=5 // pred_check
        _
      $region10: #{tpu_custom_call.1} parent=5 // pred_check_branch
        %98 = sbr.rel (%p95) target = $region12
      $region11: #{tpu_custom_call.1} parent=5 // pred_region
        %s99 = ssub.s32 %s12, 1
        // Predicated region
        $region13: #{tpu_custom_call.1} parent=11 // pred_check
          %p100 = pneg %p59
        $region14: #{tpu_custom_call.1} parent=11 // pred_check_branch
          %102 = sbr.rel (%p100) target = $region16
        $region15: #{tpu_custom_call.1} parent=11 // pred_region
          %s104 = ssub.s32 896, 896
          %105 = vsyncadd [#allocation3], %s104
          %s106 = sshll.u32 [#allocation2], 4
          %s107 = int_to_ptr.vmem [resolvable:$true] %s106
          %112 = dma.hbm_to_vmem [thread:$0]  %s1, 896, %s107, [#allocation3], 128, 128, 8
        $region16: #{tpu_custom_call.1} parent=11 // pred_fallthru
          _
      $region12: #{tpu_custom_call.1} parent=5 // pred_fallthru
        _
      %p113 = scmp.lt.s32.totalorder %s12, 3
      // Predicated region
      $region17: #{tpu_custom_call.1} parent=5 // pred_check
        %p114 = pneg %p113
      $region18: #{tpu_custom_call.1} parent=5 // pred_check_branch
        %116 = sbr.rel (%p114) target = $region20
      $region19: #{tpu_custom_call.1} parent=5 // pred_region
        // Predicated region
        $region21: #{tpu_custom_call.1} parent=19 // pred_check
          %p117 = pneg %p32
        $region22: #{tpu_custom_call.1} parent=19 // pred_check_branch
          %119 = sbr.rel (%p117) target = $region24
        $region23: #{tpu_custom_call.1} parent=19 // pred_region
          %p120 = scmp.lt.s32.totalorder %s12, 2
          %s121 = scalar_select %p120, %s12, 2
          %s122 = smul.addr %s121, 8
          %s123 = scalar_lea.vmem %s0, %s122
        $region24: #{tpu_custom_call.1} parent=19 // pred_fallthru
          _
      $region20: #{tpu_custom_call.1} parent=5 // pred_fallthru
        _
      %p124 = scmp.le.s32.totalorder 1, %s12
      %p125 = scmp.lt.s32.totalorder %s12, 4
      %p126 = pnand %p124, %p125
      %p127 = pneg %p126
      // Predicated region
      $region25: #{tpu_custom_call.1} parent=5 // pred_check
        _
      $region26: #{tpu_custom_call.1} parent=5 // pred_check_branch
        %129 = sbr.rel (%p126) target = $region28
      $region27: #{tpu_custom_call.1} parent=5 // pred_region
        %s130 = ssub.s32 %s12, 1
        // Predicated region
        $region29: #{tpu_custom_call.1} parent=27 // pred_check
          %p131 = pneg %p59
        $region30: #{tpu_custom_call.1} parent=27 // pred_check_branch
          %133 = sbr.rel (%p131) target = $region32
        $region31: #{tpu_custom_call.1} parent=27 // pred_region
          %134 = dma.done [#allocation3], 896
        $region32: #{tpu_custom_call.1} parent=27 // pred_fallthru
          _
        %p135 = scmp.lt.s32.totalorder %s17, 2
        %s136 = scalar_select %p135, %s17, 2
        %s137 = smul.addr %s136, 8
        %s138 = scalar_lea.vmem %s0, %s137
        %p139 = pneg %p38
        %p140 = pneg %p35
        %p141 = pneg %p59
        %p142 = pneg %p56
        %p143 = pneg %p85
        %p144 = pneg %p82
        %s145 = sand.u32 %s72, 1
        %s146 = scalar_lea.sflag [#allocation4], %s145
        %s147 = sand.u32 %s72, 1
        %s148 = smul.addr %s147, 8
        %s149 = scalar_lea.vmem [#allocation5], %s148
        %p150 = scmp.lt.s32.totalorder %s17, 2
        %s151 = scalar_select %p150, %s17, 2
        %s152 = smul.addr %s151, 8
        %s153 = scalar_lea.vmem %s0, %s152
        %v154 = vlaneseq
        %v155 = vand.u32 %v154, 127
        %v156 = vld [vmem:[%s153] sm:$0xff]
        %157 = vset.pattern.permute.xlu0 0
        %158 = vperm.xlu0 %157, %v156
        %v159 = vpop.permute.xlu0 %158
        %vm160 = vcmp.eq.s32.totalorder %v155, %v159
        %v161 = vsel %vm160, 1, 0
        %v162 = vcvt.s32.f32 %v161
        %v163 = vld [vmem:[#allocation2] sm:$0xff]
        %v164 = vld [vmem:[#allocation2 + $0x8] sm:$0xff]
        %v165 = vld [vmem:[#allocation2 + $0x10] sm:$0xff]
        %v166 = vld [vmem:[#allocation2 + $0x18] sm:$0xff]
        %v167 = vld [vmem:[#allocation2 + $0x20] sm:$0xff]
        %v168 = vld [vmem:[#allocation2 + $0x28] sm:$0xff]
        %v169 = vld [vmem:[#allocation2 + $0x30] sm:$0xff]
        %vm170 = vcmask 457728
        %v172 = vsel %vm170, %v162, 0
        %174 = vmatprep.subr.mxu0 0.0
        %175 = vmatpush1.msra.mxu0 %v163
        %176 = vmatprep.subr.mxu0 0.0
        %177 = vmatpush1.msra.mxu0 %v164
        %178 = vmatprep.subr.mxu0 0.0
        %179 = vmatpush1.msra.mxu0 %v165
        %180 = vmatprep.subr.mxu0 0.0
        %181 = vmatpush1.msra.mxu0 %v166
        %182 = vmatprep.subr.mxu0 0.0
        %183 = vmatpush1.msra.mxu0 %v167
        %184 = vmatprep.subr.mxu0 0.0
        %185 = vmatpush1.msra.mxu0 %v168
        %186 = vmatprep.subr.mxu0 0.0
        %187 = vmatpush1.msra.mxu0 %v169
        %188 = vmatprep.subr.mxu0 0.0
        %189 = vmatpush1.msra.mxu0 0.0
        %190 = vmatprep.subr.mxu0 0.0
        %191 = vmatpush1.msra.mxu0 0.0
        %192 = vmatprep.subr.mxu0 0.0
        %193 = vmatpush1.msra.mxu0 0.0
        %194 = vmatprep.subr.mxu0 0.0
        %195 = vmatpush1.msra.mxu0 0.0
        %196 = vmatprep.subr.mxu0 0.0
        %197 = vmatpush1.msra.mxu0 0.0
        %198 = vmatprep.subr.mxu0 0.0
        %199 = vmatpush1.msra.mxu0 0.0
        %200 = vmatprep.subr.mxu0 0.0
        %201 = vmatpush1.msra.mxu0 0.0
        %202 = vmatprep.subr.mxu0 0.0
        %203 = vmatpush1.msra.mxu0 0.0
        %204 = vmatprep.subr.mxu0 0.0
        %205 = vmatpush1.msra.mxu0 0.0
        %206 = vmatprep.subr.mxu0 0.0
        %207 = vmatpush1.msra.mxu0 0.0
        %208 = vmatprep.subr.mxu0 0.0
        %209 = vmatpush1.msra.mxu0 0.0
        %210 = vmatprep.subr.mxu0 0.0
        %211 = vmatpush1.msra.mxu0 0.0
        %212 = vmatprep.subr.mxu0 0.0
        %213 = vmatpush1.msra.mxu0 0.0
        %214 = vmatprep.subr.mxu0 0.0
        %215 = vmatpush1.msra.mxu0 0.0
        %216 = vmatprep.subr.mxu0 0.0
        %217 = vmatpush1.msra.mxu0 0.0
        %218 = vmatprep.subr.mxu0 0.0
        %219 = vmatpush1.msra.mxu0 0.0
        %220 = vmatprep.subr.mxu0 0.0
        %221 = vmatpush1.msra.mxu0 0.0
        %222 = vmatprep.subr.mxu0 0.0
        %223 = vmatpush1.msra.mxu0 0.0
        %224 = vmatprep.subr.mxu0 0.0
        %225 = vmatpush1.msra.mxu0 0.0
        %226 = vmatprep.subr.mxu0 0.0
        %227 = vmatpush1.msra.mxu0 0.0
        %228 = vmatprep.subr.mxu0 0.0
        %229 = vmatpush1.msra.mxu0 0.0
        %230 = vmatprep.subr.mxu0 0.0
        %231 = vmatpush1.msra.mxu0 0.0
        %232 = vmatprep.subr.mxu0 0.0
        %233 = vmatpush1.msra.mxu0 0.0
        %234 = vmatprep.subr.mxu0 0.0
        %235 = vmatpush1.msra.mxu0 0.0
        %236 = vmatprep.subr.mxu0 0.0
        %237 = vmatpush1.msra.mxu0 0.0
        %238 = vmatprep.mubr.f32.mxu0 0.0
        %239 = vmatmul.mubr.f32.gmra.mrb[0].mxu0 %v172
        %v240 = vpop.f32.mrb[0].mxu0
        %v241 = vadd.f32 0.0, %v240
        %v242 = vpop.f32.mrb[0].mxu0
        %243 = vdwg.mxu0
        %244 = vst [vmem:[%s149] sm:$0xff] %v241
        %s245 = sand.u32 %s72, 1
        %s246 = scalar_lea.sflag [#allocation4], %s245
        %s247 = sand.u32 %s72, 1
        %s248 = smul.addr %s247, 8
        %s249 = scalar_lea.vmem [#allocation5], %s248
        // Predicated region
        $region33: #{tpu_custom_call.1} parent=27 // pred_check
          %p250 = pneg %p82
        $region34: #{tpu_custom_call.1} parent=27 // pred_check_branch
          %252 = sbr.rel (%p250) target = $region36
        $region35: #{tpu_custom_call.1} parent=27 // pred_region
          %s254 = ssub.s32 128, 128
          %255 = vsyncadd %s246, %s254
          %s256 = smul.addr %s17, 128
          %s257 = scalar_lea.hbm %s2, %s256
          %s259 = sshll.u32 %s249, 4
          %s260 = int_to_ptr.vmem [resolvable:$true] %s259
          %262 = dma.vmem_to_hbm [thread:$0]  %s260, 128, %s257, %s246
        $region36: #{tpu_custom_call.1} parent=27 // pred_fallthru
          _
      $region28: #{tpu_custom_call.1} parent=5 // pred_fallthru
        _
      %p263 = scmp.le.s32.totalorder 2, %s12
      // Predicated region
      $region37: #{tpu_custom_call.1} parent=5 // pred_check
        %p264 = pneg %p263
      $region38: #{tpu_custom_call.1} parent=5 // pred_check_branch
        %266 = sbr.rel (%p264) target = $region40
      $region39: #{tpu_custom_call.1} parent=5 // pred_region
        %s267 = ssub.s32 %s12, 2
        // Predicated region
        $region41: #{tpu_custom_call.1} parent=39 // pred_check
          %p268 = pneg %p88
        $region42: #{tpu_custom_call.1} parent=39 // pred_check_branch
          %270 = sbr.rel (%p268) target = $region44
        $region43: #{tpu_custom_call.1} parent=39 // pred_region
          %s271 = sand.u32 %s73, 1
          %s272 = scalar_lea.sflag [#allocation4], %s271
          %s273 = sand.u32 %s73, 1
          %s274 = smul.addr %s273, 8
          %s275 = scalar_lea.vmem [#allocation5], %s274
          %276 = dma.done %s272, 128
        $region44: #{tpu_custom_call.1} parent=39 // pred_fallthru
          _
      $region40: #{tpu_custom_call.1} parent=5 // pred_fallthru
        _
    $region6: #{tpu_custom_call.1} parent=1 // loop_footer
      %s16 = sadd.s32 1, %s12
    $region7: #{tpu_custom_call.1} parent=1 // loop_footer_branch
      %11 = sbr.rel target = $region3
    $region8: #{tpu_custom_call.1} parent=1 // loop_exit
      _
    %277 = vsyncpa [#allocation3], 1
    %s278 = scalar_lea.sflag [#allocation3], 1
    %279 = vsyncpa %s278, 1
    %280 = vsyncpa [#allocation4], 1
    %s281 = scalar_lea.sflag [#allocation4], 1
    %282 = vsyncpa %s281, 1

</llo_original>
